<compile_context>
chip_gen: v6e
topology: v6e:2x2x1
jax: 0.10.0
libtpu: 0.0.40
codegen_flags: <defaults>
</compile_context>

<pallas_src>
import functools
import math

import jax
import jax.numpy as jnp
from jax import lax
from jax.experimental import pallas as pl
from jax.experimental.pallas import tpu as pltpu

D_MODEL = 32
MAX_LEN = 64
P_DROP = 0.1

# Per-tile byte budget for one x block.  Input + output are each double
# buffered by the pipeline, so the live footprint is ~4x this value.
_TILE_BYTES = 2 * 1024 * 1024


def _i32(v: int) -> jnp.ndarray:
    """Python int -> wrapped int32 constant (so 0x846CA68B etc. don't overflow)."""
    v &= 0xFFFFFFFF
    if v >= 1 << 31:
        v -= 1 << 32
    return jnp.int32(v)


def _srl(x, k: int):
    """Logical right shift on int32 (arithmetic shift + mask off sign bits)."""
    return (x >> k) & _i32((1 << (32 - k)) - 1)


def _mix32(x):
    """splitmix32-style finalizer: int32 in, well-mixed int32 out."""
    x = x ^ _srl(x, 16)
    x = x * _i32(0x7FEB352D)
    x = x ^ _srl(x, 15)
    x = x * _i32(0x846CA68B)
    x = x ^ _srl(x, 16)
    return x


def _pe_dropout_kernel(seed_ref, x_ref, pe_ref, rep_ref, o_ref, *,
                       p_drop: float, training: bool):
    # seed_ref: (1,) int32 in SMEM
    # x_ref   : (TS, B*D) lane-dense slab tile
    # pe_ref  : (TS, D)   sinusoidal rows for this tile
    # rep_ref : (D, B*D)  0/1 replication matrix (B copies of I_D side by side)
    x = x_ref[...].astype(jnp.float32)

    # Lane-broadcast pe (TS, D) -> (TS, B*D) as a tiny matmul on the idle MXU.
    # rep is 0/1, so with HIGHEST precision the result is exactly the broadcast.
    pe_bd = jnp.dot(pe_ref[...], rep_ref[...],
                    preferred_element_type=jnp.float32,
                    precision=lax.Precision.HIGHEST)
    y = x + pe_bd

    if training and p_drop > 0.0:
        rows, cols = y.shape
        # Counter-based PRNG: hash(global element index ^ seed-salt).  The mask
        # is tiling-invariant and differs per grid step (program_id enters via
        # the global row index), fixing the "same mask every tile" hazard.
        r = lax.broadcasted_iota(jnp.int32, (rows, cols), 0)
        c = lax.broadcasted_iota(jnp.int32, (rows, cols), 1)
        row0 = pl.program_id(0) * rows
        gidx = (row0 + r) * cols + c
        salt = seed_ref[0] * _i32(0x9E3779B1)
        bits = _mix32(gidx ^ salt)
        # Uniform in [0, 1) from the 24 mixed high-ish bits (kept non-negative
        # so plain signed int -> float conversion is safe).
        u = _srl(bits, 8).astype(jnp.float32) * jnp.float32(1.0 / (1 << 24))
        keep = (u >= jnp.float32(p_drop)).astype(jnp.float32)
        # multiply-by-mask instead of select; scale kept elements by 1/(1-p)
        y = y * (keep * jnp.float32(1.0 / (1.0 - p_drop)))

    o_ref[...] = y.astype(o_ref.dtype)


def make_pe_table(d_model: int, max_len: int) -> jnp.ndarray:
    """Deterministic sinusoidal table, identical to the PyTorch __init__ buffer."""
    position = jnp.arange(max_len, dtype=jnp.float32)[:, None]               # (L, 1)
    div_term = jnp.exp(
        jnp.arange(0, d_model, 2, dtype=jnp.float32) * (-math.log(10000.0) / d_model)
    )                                                                        # (D/2,)
    pe = jnp.zeros((max_len, 1, d_model), dtype=jnp.float32)
    pe = pe.at[:, 0, 0::2].set(jnp.sin(position * div_term))
    pe = pe.at[:, 0, 1::2].set(jnp.cos(position * div_term))
    return pe


def _choose_row_tile(n_rows: int, row_bytes: int) -> int:
    """Largest row tile (multiple of 8, or the full extent) within _TILE_BYTES."""
    if n_rows * row_bytes <= _TILE_BYTES:
        return n_rows
    t = (_TILE_BYTES // max(row_bytes, 1)) // 8 * 8
    return int(max(8, min(t, n_rows)))


@functools.partial(jax.jit, static_argnames=("training",))
def positional_encoding(x, pe_table, seed, *, training: bool = True):
    """x: (S, B, D); pe_table: (max_len, 1, D) buffer; seed: (1,) int32.

    NOTE: supply a fresh `seed` every training step, otherwise the same dropout
    mask is reused across forward passes.
    """
    S, B, D = x.shape
    BD = B * D
    x2d = x.reshape(S, BD)                      # lane-dense slab (minor dim = B*D)
    pe2d = pe_table[:S, 0, :]                   # (S, D), small, streamed per tile
    # (D, B*D) replication matrix: B copies of I_D side by side.  Tiny for this
    # module (d_model=32) and VMEM-resident for the whole grid.
    rep = jnp.tile(jnp.eye(D, dtype=jnp.float32), (1, B))

    ts = _choose_row_tile(S, BD * x.dtype.itemsize)
    grid = (pl.cdiv(S, ts),)                    # ragged last tile is padded/masked

    kernel = functools.partial(_pe_dropout_kernel, p_drop=P_DROP, training=training)
    out2d = pl.pallas_call(
        kernel,
        out_shape=jax.ShapeDtypeStruct((S, BD), x.dtype),
        grid=grid,
        in_specs=[
            pl.BlockSpec(memory_space=pltpu.SMEM),        # seed scalar
            pl.BlockSpec((ts, BD), lambda i: (i, 0)),     # x rows (pipelined)
            pl.BlockSpec((ts, D), lambda i: (i, 0)),      # pe rows (pipelined)
            pl.BlockSpec((D, BD), lambda i: (0, 0)),      # rep matrix (resident)
        ],
        out_specs=pl.BlockSpec((ts, BD), lambda i: (i, 0)),
        compiler_params=pltpu.CompilerParams(
            dimension_semantics=("parallel",)),           # shards tiles on v7x's 2 TCs
    )(seed, x2d, pe2d, rep)
    return out2d.reshape(S, B, D)


if __name__ == "__main__":
    seq_len, batch, d_model = 8, 2, D_MODEL
    key = jax.random.PRNGKey(0)

    x = jax.random.normal(key, (seq_len, batch, d_model), dtype=jnp.float32)
    pe_full = make_pe_table(d_model, MAX_LEN)
    seed = jnp.array([123], dtype=jnp.int32)

    # Eval mode (dropout = identity): must equal x + pe[:S].
    out_eval = positional_encoding(x, pe_full, seed, training=False)
    jax.block_until_ready(out_eval)
    ref = x + pe_full[:seq_len]
    assert out_eval.shape == (seq_len, batch, d_model)
    assert jnp.allclose(out_eval, ref, atol=1e-5), "eval-mode mismatch"

    # Training mode: every element is either 0 (dropped) or (x+pe)/(1-p) (kept).
    out_train = positional_encoding(x, pe_full, seed, training=True)
    jax.block_until_ready(out_train)
    assert out_train.shape == (seq_len, batch, d_model)
    scaled = ref / (1.0 - P_DROP)
    recon = jnp.where(out_train != 0.0, scaled, 0.0)
    assert jnp.allclose(out_train, recon, atol=1e-4), "dropout structure mismatch"
    n_drop = int(jnp.sum(out_train == 0.0))
    assert 0 < n_drop < out_train.size, f"implausible dropout count: {n_drop}"

    print("KERNEL_OK")
</pallas_src>

<mosaic_0001>
module attributes {stable_mosaic.version = 11 : i64} {
  func.func @_pe_dropout_kernel(%arg0: i32, %arg1: memref<1xi32, #tpu.memory_space<smem>>, %arg2: memref<8x64xf32, #tpu.memory_space<vmem>>, %arg3: memref<8x32xf32, #tpu.memory_space<vmem>>, %arg4: memref<32x64xf32, #tpu.memory_space<vmem>>, %arg5: memref<8x64xf32, #tpu.memory_space<vmem>>) attributes {dimension_semantics = [#tpu.dimension_semantics<parallel>], iteration_bounds = array<i64: 1>, scalar_prefetch = 0 : i64, scratch_operands = 0 : i64, tpu.core_type = #tpu.core_type<tc>, window_params = [{transform_indices = @transform_0, window_bounds = array<i64: 1>}, {transform_indices = @transform_1, window_bounds = array<i64: 8, 64>}, {transform_indices = @transform_2, window_bounds = array<i64: 8, 32>}, {pipeline_mode = #tpu.pipeline_mode<synchronous>, transform_indices = @transform_3, window_bounds = array<i64: 32, 64>}, {transform_indices = @transform_4, window_bounds = array<i64: 8, 64>}]} {
    %c0 = arith.constant 0 : index
    %c0_0 = arith.constant 0 : index
    %0 = vector.load %arg2[%c0, %c0_0] : memref<8x64xf32, #tpu.memory_space<vmem>>, vector<8x64xf32>
    %c0_1 = arith.constant 0 : index
    %c0_2 = arith.constant 0 : index
    %1 = vector.load %arg3[%c0_1, %c0_2] : memref<8x32xf32, #tpu.memory_space<vmem>>, vector<8x32xf32>
    %c0_3 = arith.constant 0 : index
    %c0_4 = arith.constant 0 : index
    %2 = vector.load %arg4[%c0_3, %c0_4] : memref<32x64xf32, #tpu.memory_space<vmem>>, vector<32x64xf32>
    %cst = arith.constant dense<0.000000e+00> : vector<8x64xf32>
    %3 = tpu.matmul %1, %2, %cst {dimension_numbers = #tpu.dot_dimension_numbers<[1], [0], [0], [1], [0, 0, 1, 1], [], []>, precision = #tpu.contract_precision<fp32>} : vector<8x32xf32>, vector<32x64xf32>, vector<8x64xf32> -> vector<8x64xf32>
    %4 = arith.addf %0, %3 : vector<8x64xf32>
    %c0_5 = arith.constant 0 : index
    %c0_6 = arith.constant 0 : index
    %5 = vector.load %arg5[%c0_5, %c0_6] : memref<8x64xf32, #tpu.memory_space<vmem>>, vector<8x64xf32>
    tpu.vector_store %arg5[%c0_5, %c0_6], %4 {strides = array<i32>} : memref<8x64xf32, #tpu.memory_space<vmem>>, vector<8x64xf32>,
    return
  }
  func.func @transform_0(%arg0: i32) -> i32 {
    %c0_i32 = arith.constant 0 : i32
    %c0_i32_0 = arith.constant 0 : i32
    return %c0_i32 : i32
  }
  func.func @transform_1(%arg0: i32) -> (i32, i32) {
    %c0_i32 = arith.constant 0 : i32
    %c0_i32_0 = arith.constant 0 : i32
    return %arg0, %c0_i32 : i32, i32
  }
  func.func @transform_2(%arg0: i32) -> (i32, i32) {
    %c0_i32 = arith.constant 0 : i32
    %c0_i32_0 = arith.constant 0 : i32
    return %arg0, %c0_i32 : i32, i32
  }
  func.func @transform_3(%arg0: i32) -> (i32, i32) {
    %c0_i32 = arith.constant 0 : i32
    %c0_i32_0 = arith.constant 0 : i32
    %c0_i32_1 = arith.constant 0 : i32
    return %c0_i32, %c0_i32_0 : i32, i32
  }
  func.func @transform_4(%arg0: i32) -> (i32, i32) {
    %c0_i32 = arith.constant 0 : i32
    %c0_i32_0 = arith.constant 0 : i32
    return %arg0, %c0_i32 : i32, i32
  }
}

</mosaic_0001>

<llo_original>
// kernel: tile.9
$region0: #{tile.9}
  %s0 = inlined_call_operand.vmem [shape: f32[32,2,32], index: 0, kind: input, shape index: {}]
  %s1 = inlined_call_operand.vmem [shape: f32[32,64], index: 1, kind: output, shape index: {}]
  $region1: #{tile.9} parent=0
    #allocation0 [shape = 'u8[131072]{0}', space=vmem, size = 0x20000, scoped, tag = 'scoped mem for input reshape']
    %s3 = sshll.u32 1, 2
    %s4 = ssub.s32 %s3, 1
    %s5 = smul.addr 2, 31
    %s6 = scalar_lea.vmem %s0, %s5
    %v7 = vld [vmem:[%s6] sm:%s4]
    %s8 = scalar_lea.vmem [#allocation0], 248
    %9 = vst [vmem:[%s8] sm:%s4] %v7
    %s10 = smul.addr 2, 30
    %s11 = scalar_lea.vmem %s0, %s10
    %v12 = vld [vmem:[%s11] sm:%s4]
    %s13 = scalar_lea.vmem [#allocation0], 240
    %14 = vst [vmem:[%s13] sm:%s4] %v12
    %s15 = smul.addr 2, 29
    %s16 = scalar_lea.vmem %s0, %s15
    %v17 = vld [vmem:[%s16] sm:%s4]
    %s18 = scalar_lea.vmem [#allocation0], 232
    %19 = vst [vmem:[%s18] sm:%s4] %v17
    %s20 = smul.addr 2, 28
    %s21 = scalar_lea.vmem %s0, %s20
    %v22 = vld [vmem:[%s21] sm:%s4]
    %s23 = scalar_lea.vmem [#allocation0], 224
    %24 = vst [vmem:[%s23] sm:%s4] %v22
    %s25 = smul.addr 2, 27
    %s26 = scalar_lea.vmem %s0, %s25
    %v27 = vld [vmem:[%s26] sm:%s4]
    %s28 = scalar_lea.vmem [#allocation0], 216
    %29 = vst [vmem:[%s28] sm:%s4] %v27
    %s30 = smul.addr 2, 26
    %s31 = scalar_lea.vmem %s0, %s30
    %v32 = vld [vmem:[%s31] sm:%s4]
    %s33 = scalar_lea.vmem [#allocation0], 208
    %34 = vst [vmem:[%s33] sm:%s4] %v32
    %s35 = smul.addr 2, 25
    %s36 = scalar_lea.vmem %s0, %s35
    %v37 = vld [vmem:[%s36] sm:%s4]
    %s38 = scalar_lea.vmem [#allocation0], 200
    %39 = vst [vmem:[%s38] sm:%s4] %v37
    %s40 = smul.addr 2, 24
    %s41 = scalar_lea.vmem %s0, %s40
    %v42 = vld [vmem:[%s41] sm:%s4]
    %s43 = scalar_lea.vmem [#allocation0], 192
    %44 = vst [vmem:[%s43] sm:%s4] %v42
    %s45 = smul.addr 2, 23
    %s46 = scalar_lea.vmem %s0, %s45
    %v47 = vld [vmem:[%s46] sm:%s4]
    %s48 = scalar_lea.vmem [#allocation0], 184
    %49 = vst [vmem:[%s48] sm:%s4] %v47
    %s50 = smul.addr 2, 22
    %s51 = scalar_lea.vmem %s0, %s50
    %v52 = vld [vmem:[%s51] sm:%s4]
    %s53 = scalar_lea.vmem [#allocation0], 176
    %54 = vst [vmem:[%s53] sm:%s4] %v52
    %s55 = smul.addr 2, 21
    %s56 = scalar_lea.vmem %s0, %s55
    %v57 = vld [vmem:[%s56] sm:%s4]
    %s58 = scalar_lea.vmem [#allocation0], 168
    %59 = vst [vmem:[%s58] sm:%s4] %v57
    %s60 = smul.addr 2, 20
    %s61 = scalar_lea.vmem %s0, %s60
    %v62 = vld [vmem:[%s61] sm:%s4]
    %s63 = scalar_lea.vmem [#allocation0], 160
    %64 = vst [vmem:[%s63] sm:%s4] %v62
    %s65 = smul.addr 2, 19
    %s66 = scalar_lea.vmem %s0, %s65
    %v67 = vld [vmem:[%s66] sm:%s4]
    %s68 = scalar_lea.vmem [#allocation0], 152
    %69 = vst [vmem:[%s68] sm:%s4] %v67
    %s70 = smul.addr 2, 18
    %s71 = scalar_lea.vmem %s0, %s70
    %v72 = vld [vmem:[%s71] sm:%s4]
    %s73 = scalar_lea.vmem [#allocation0], 144
    %74 = vst [vmem:[%s73] sm:%s4] %v72
    %s75 = smul.addr 2, 17
    %s76 = scalar_lea.vmem %s0, %s75
    %v77 = vld [vmem:[%s76] sm:%s4]
    %s78 = scalar_lea.vmem [#allocation0], 136
    %79 = vst [vmem:[%s78] sm:%s4] %v77
    %s80 = smul.addr 2, 16
    %s81 = scalar_lea.vmem %s0, %s80
    %v82 = vld [vmem:[%s81] sm:%s4]
    %s83 = scalar_lea.vmem [#allocation0], 128
    %84 = vst [vmem:[%s83] sm:%s4] %v82
    %s85 = smul.addr 2, 15
    %s86 = scalar_lea.vmem %s0, %s85
    %v87 = vld [vmem:[%s86] sm:%s4]
    %s88 = scalar_lea.vmem [#allocation0], 120
    %89 = vst [vmem:[%s88] sm:%s4] %v87
    %s90 = smul.addr 2, 14
    %s91 = scalar_lea.vmem %s0, %s90
    %v92 = vld [vmem:[%s91] sm:%s4]
    %s93 = scalar_lea.vmem [#allocation0], 112
    %94 = vst [vmem:[%s93] sm:%s4] %v92
    %s95 = smul.addr 2, 13
    %s96 = scalar_lea.vmem %s0, %s95
    %v97 = vld [vmem:[%s96] sm:%s4]
    %s98 = scalar_lea.vmem [#allocation0], 104
    %99 = vst [vmem:[%s98] sm:%s4] %v97
    %s100 = smul.addr 2, 12
    %s101 = scalar_lea.vmem %s0, %s100
    %v102 = vld [vmem:[%s101] sm:%s4]
    %s103 = scalar_lea.vmem [#allocation0], 96
    %104 = vst [vmem:[%s103] sm:%s4] %v102
    %s105 = smul.addr 2, 11
    %s106 = scalar_lea.vmem %s0, %s105
    %v107 = vld [vmem:[%s106] sm:%s4]
    %s108 = scalar_lea.vmem [#allocation0], 88
    %109 = vst [vmem:[%s108] sm:%s4] %v107
    %s110 = smul.addr 2, 10
    %s111 = scalar_lea.vmem %s0, %s110
    %v112 = vld [vmem:[%s111] sm:%s4]
    %s113 = scalar_lea.vmem [#allocation0], 80
    %114 = vst [vmem:[%s113] sm:%s4] %v112
    %s115 = smul.addr 2, 9
    %s116 = scalar_lea.vmem %s0, %s115
    %v117 = vld [vmem:[%s116] sm:%s4]
    %s118 = scalar_lea.vmem [#allocation0], 72
    %119 = vst [vmem:[%s118] sm:%s4] %v117
    %s120 = smul.addr 2, 8
    %s121 = scalar_lea.vmem %s0, %s120
    %v122 = vld [vmem:[%s121] sm:%s4]
    %s123 = scalar_lea.vmem [#allocation0], 64
    %124 = vst [vmem:[%s123] sm:%s4] %v122
    %s125 = smul.addr 2, 7
    %s126 = scalar_lea.vmem %s0, %s125
    %v127 = vld [vmem:[%s126] sm:%s4]
    %s128 = scalar_lea.vmem [#allocation0], 56
    %129 = vst [vmem:[%s128] sm:%s4] %v127
    %s130 = smul.addr 2, 6
    %s131 = scalar_lea.vmem %s0, %s130
    %v132 = vld [vmem:[%s131] sm:%s4]
    %s133 = scalar_lea.vmem [#allocation0], 48
    %134 = vst [vmem:[%s133] sm:%s4] %v132
    %s135 = smul.addr 2, 5
    %s136 = scalar_lea.vmem %s0, %s135
    %v137 = vld [vmem:[%s136] sm:%s4]
    %s138 = scalar_lea.vmem [#allocation0], 40
    %139 = vst [vmem:[%s138] sm:%s4] %v137
    %s140 = smul.addr 2, 4
    %s141 = scalar_lea.vmem %s0, %s140
    %v142 = vld [vmem:[%s141] sm:%s4]
    %s143 = scalar_lea.vmem [#allocation0], 32
    %144 = vst [vmem:[%s143] sm:%s4] %v142
    %s145 = smul.addr 2, 3
    %s146 = scalar_lea.vmem %s0, %s145
    %v147 = vld [vmem:[%s146] sm:%s4]
    %s148 = scalar_lea.vmem [#allocation0], 24
    %149 = vst [vmem:[%s148] sm:%s4] %v147
    %s150 = smul.addr 2, 2
    %s151 = scalar_lea.vmem %s0, %s150
    %v152 = vld [vmem:[%s151] sm:%s4]
    %s153 = scalar_lea.vmem [#allocation0], 16
    %154 = vst [vmem:[%s153] sm:%s4] %v152
    %s155 = scalar_lea.vmem %s0, 2
    %v156 = vld [vmem:[%s155] sm:%s4]
    %s157 = scalar_lea.vmem [#allocation0], 8
    %158 = vst [vmem:[%s157] sm:%s4] %v156
    %v159 = vld [vmem:[%s0] sm:%s4]
    %160 = vst [vmem:[#allocation0] sm:%s4] %v159
    %v161 = vld [vmem:[#allocation0] ss:$8 sm:$0xf]
    %v162 = vld [vmem:[#allocation0] ss:$8 sm:$0xf0]
    %vm163 = vcmask 1047556
    %v164 = vsel %vm163, %v162, %v161
    %vm165 = vcmask 261120
    %166 = vst.msk [vmem:[%s1] sm:$0xff] %vm165, %v164
    %s167 = scalar_lea.vmem [#allocation0], 64
    %v168 = vld [vmem:[%s167] ss:$8 sm:$0xf]
    %s169 = scalar_lea.vmem [#allocation0], 64
    %v170 = vld [vmem:[%s169] ss:$8 sm:$0xf0]
    %vm171 = vcmask 1047556
    %v172 = vsel %vm171, %v170, %v168
    %vm173 = vcmask 261120
    %s174 = scalar_lea.vmem %s1, 8
    %175 = vst.msk [vmem:[%s174] sm:$0xff] %vm173, %v172
    %s176 = scalar_lea.vmem [#allocation0], 128
    %v177 = vld [vmem:[%s176] ss:$8 sm:$0xf]
    %s178 = scalar_lea.vmem [#allocation0], 128
    %v179 = vld [vmem:[%s178] ss:$8 sm:$0xf0]
    %vm180 = vcmask 1047556
    %v181 = vsel %vm180, %v179, %v177
    %vm182 = vcmask 261120
    %s183 = scalar_lea.vmem %s1, 16
    %184 = vst.msk [vmem:[%s183] sm:$0xff] %vm182, %v181
    %s185 = scalar_lea.vmem [#allocation0], 192
    %v186 = vld [vmem:[%s185] ss:$8 sm:$0xf]
    %s187 = scalar_lea.vmem [#allocation0], 192
    %v188 = vld [vmem:[%s187] ss:$8 sm:$0xf0]
    %vm189 = vcmask 1047556
    %v190 = vsel %vm189, %v188, %v186
    %vm191 = vcmask 261120
    %s192 = scalar_lea.vmem %s1, 24
    %193 = vst.msk [vmem:[%s192] sm:$0xff] %vm191, %v190
    %s194 = scalar_lea.vmem [#allocation0], 1
    %v195 = vld [vmem:[%s194] ss:$8 sm:$0xf]
    %s196 = scalar_lea.vmem [#allocation0], 1
    %v197 = vld [vmem:[%s196] ss:$8 sm:$0xf0]
    %vm198 = vcmask 1047556
    %v199 = vsel %vm198, %v197, %v195
    %200 = vrot.lane.b32.xlu0 %v199, 32
    %v201 = vpop.permute.xlu0 %200
    %vm202 = vcmask 523520
    %203 = vst.msk [vmem:[%s1] sm:$0xff] %vm202, %v201
    %s204 = scalar_lea.vmem [#allocation0], 65
    %v205 = vld [vmem:[%s204] ss:$8 sm:$0xf]
    %s206 = scalar_lea.vmem [#allocation0], 65
    %v207 = vld [vmem:[%s206] ss:$8 sm:$0xf0]
    %vm208 = vcmask 1047556
    %v209 = vsel %vm208, %v207, %v205
    %210 = vrot.lane.b32.xlu0 %v209, 32
    %v211 = vpop.permute.xlu0 %210
    %vm212 = vcmask 523520
    %s213 = scalar_lea.vmem %s1, 8
    %214 = vst.msk [vmem:[%s213] sm:$0xff] %vm212, %v211
    %s215 = scalar_lea.vmem [#allocation0], 129
    %v216 = vld [vmem:[%s215] ss:$8 sm:$0xf]
    %s217 = scalar_lea.vmem [#allocation0], 129
    %v218 = vld [vmem:[%s217] ss:$8 sm:$0xf0]
    %vm219 = vcmask 1047556
    %v220 = vsel %vm219, %v218, %v216
    %221 = vrot.lane.b32.xlu0 %v220, 32
    %v222 = vpop.permute.xlu0 %221
    %vm223 = vcmask 523520
    %s224 = scalar_lea.vmem %s1, 16
    %225 = vst.msk [vmem:[%s224] sm:$0xff] %vm223, %v222
    %s226 = scalar_lea.vmem [#allocation0], 193
    %v227 = vld [vmem:[%s226] ss:$8 sm:$0xf]
    %s228 = scalar_lea.vmem [#allocation0], 193
    %v229 = vld [vmem:[%s228] ss:$8 sm:$0xf0]
    %vm230 = vcmask 1047556
    %v231 = vsel %vm230, %v229, %v227
    %232 = vrot.lane.b32.xlu0 %v231, 32
    %v233 = vpop.permute.xlu0 %232
    %vm234 = vcmask 523520
    %s235 = scalar_lea.vmem %s1, 24
    %236 = vst.msk [vmem:[%s235] sm:$0xff] %vm234, %v233

// kernel: positional_encoding.1
$region0: #{positional_encoding.1}
  #allocation0 [shape = 'u32[]', space=smem, size = 0x4, offset = 0x4, fixed_abs, tag = 'smem constant byte address 0x4 - core index']
  #allocation1 [shape = 'u32[144,128]{1,0:T(1,128)}', space=vmem, size = 0x12000, scoped, tag = 'internal scratch']
  #allocation2 [shape = 's32[1]{0:T(128)S(6)}', space=smem, size = 0x200, scoped, tag = 'scoped memory for positional_encoding.1']
  %s0 = inlined_call_operand.<no memory space> [shape: s32[1], index: 0, kind: input, shape index: {}]
  %s1 = inlined_call_operand.vmem [shape: f32[8,64], index: 1, kind: input, shape index: {}]
  %s2 = inlined_call_operand.vmem [shape: f32[8,32], index: 2, kind: input, shape index: {}]
  %s3 = inlined_call_operand.vmem [shape: f32[32,64], index: 3, kind: input, shape index: {}]
  %s4 = inlined_call_operand.vmem [shape: f32[8,64], index: 4, kind: output, shape index: {}]
  %s5 = sld [smem:[#allocation0]]
  $region26: #{positional_encoding.1} parent=0
    _
  %s7 = ssub.s32 1, %s5
  %s8 = scalar_select 0, %s7, %s5
  %9 = sst [smem:[#allocation2]] %s0
  // Predicated region
  $region2: #{positional_encoding.1} parent=0 // pred_check
    _
  $region3: #{positional_encoding.1} parent=0 // pred_check_branch
    %11 = sbr.rel (0) target = $region5
  $region4: #{positional_encoding.1} parent=0 // pred_region
    _
  $region5: #{positional_encoding.1} parent=0 // pred_fallthru
    _
  // Predicated region
  $region6: #{positional_encoding.1} parent=0 // pred_check
    _
  $region7: #{positional_encoding.1} parent=0 // pred_check_branch
    %13 = sbr.rel (0) target = $region9
  $region8: #{positional_encoding.1} parent=0 // pred_region
    _
  $region9: #{positional_encoding.1} parent=0 // pred_fallthru
    _
  // Predicated region
  $region10: #{positional_encoding.1} parent=0 // pred_check
    _
  $region11: #{positional_encoding.1} parent=0 // pred_check_branch
    %15 = sbr.rel (0) target = $region13
  $region12: #{positional_encoding.1} parent=0 // pred_region
    _
  $region13: #{positional_encoding.1} parent=0 // pred_fallthru
    _
  // Predicated region
  $region14: #{positional_encoding.1} parent=0 // pred_check
    _
  $region15: #{positional_encoding.1} parent=0 // pred_check_branch
    %17 = sbr.rel (0) target = $region17
  $region16: #{positional_encoding.1} parent=0 // pred_region
    _
  $region17: #{positional_encoding.1} parent=0 // pred_fallthru
    _
  %v18 = vld [vmem:[%s1] sm:$0xff]
  %v19 = vld [vmem:[%s2] sm:$0xff]
  %v20 = vld [vmem:[%s3] sm:$0xff]
  %v21 = vld [vmem:[%s3 + $0x8] sm:$0xff]
  %v22 = vld [vmem:[%s3 + $0x10] sm:$0xff]
  %v23 = vld [vmem:[%s3 + $0x18] sm:$0xff]
  %vm24 = vcmask 261120
  %v26 = vsel %vm24, %v19, 0
  %28 = vmatprep.subr.mxu0 0.0
  %29 = vmatpush1.msra.mxu0 0.0
  %30 = vmatprep.subr.mxu0 0.0
  %31 = vmatpush1.msra.mxu0 0.0
  %32 = vmatprep.subr.mxu0 0.0
  %33 = vmatpush1.msra.mxu0 0.0
  %34 = vmatprep.subr.mxu0 0.0
  %35 = vmatpush1.msra.mxu0 0.0
  %36 = vmatprep.subr.mxu0 0.0
  %37 = vmatpush1.msra.mxu0 0.0
  %38 = vmatprep.subr.mxu0 0.0
  %39 = vmatpush1.msra.mxu0 0.0
  %40 = vmatprep.subr.mxu0 0.0
  %41 = vmatpush1.msra.mxu0 0.0
  %42 = vmatprep.subr.mxu0 0.0
  %43 = vmatpush1.msra.mxu0 0.0
  %44 = vmatprep.subr.mxu0 0.0
  %45 = vmatpush1.msra.mxu0 0.0
  %46 = vmatprep.subr.mxu0 0.0
  %47 = vmatpush1.msra.mxu0 0.0
  %48 = vmatprep.subr.mxu0 0.0
  %49 = vmatpush1.msra.mxu0 0.0
  %50 = vmatprep.subr.mxu0 0.0
  %51 = vmatpush1.msra.mxu0 0.0
  %52 = vmatprep.subr.mxu0 0.0
  %v53 = vand.u32 %v23, 4294901760
  %54 = vmatpush1.msra.mxu0 %v53
  %55 = vmatprep.subr.mxu0 0.0
  %v56 = vand.u32 %v22, 4294901760
  %57 = vmatpush1.msra.mxu0 %v56
  %58 = vmatprep.subr.mxu0 0.0
  %v59 = vand.u32 %v21, 4294901760
  %60 = vmatpush1.msra.mxu0 %v59
  %61 = vmatprep.subr.mxu0 0.0
  %v62 = vand.u32 %v20, 4294901760
  %63 = vmatpush1.msra.mxu0 %v62
  %64 = vmatprep.subr.mxu0 0.0
  %65 = vmatpush2.msra.mxu0 0.0
  %66 = vmatprep.subr.mxu0 0.0
  %67 = vmatpush2.msra.mxu0 0.0
  %68 = vmatprep.subr.mxu0 0.0
  %69 = vmatpush2.msra.mxu0 0.0
  %70 = vmatprep.subr.mxu0 0.0
  %71 = vmatpush2.msra.mxu0 0.0
  %72 = vmatprep.subr.mxu0 0.0
  %73 = vmatpush2.msra.mxu0 0.0
  %74 = vmatprep.subr.mxu0 0.0
  %75 = vmatpush2.msra.mxu0 0.0
  %76 = vmatprep.subr.mxu0 0.0
  %77 = vmatpush2.msra.mxu0 0.0
  %78 = vmatprep.subr.mxu0 0.0
  %79 = vmatpush2.msra.mxu0 0.0
  %80 = vmatprep.subr.mxu0 0.0
  %81 = vmatpush2.msra.mxu0 0.0
  %82 = vmatprep.subr.mxu0 0.0
  %83 = vmatpush2.msra.mxu0 0.0
  %84 = vmatprep.subr.mxu0 0.0
  %85 = vmatpush2.msra.mxu0 0.0
  %86 = vmatprep.subr.mxu0 0.0
  %87 = vmatpush2.msra.mxu0 0.0
  %88 = vmatprep.subr.mxu0 0.0
  %89 = vmatpush2.msra.mxu0 0.0
  %90 = vmatprep.subr.mxu0 0.0
  %91 = vmatpush2.msra.mxu0 0.0
  %92 = vmatprep.subr.mxu0 0.0
  %93 = vmatpush2.msra.mxu0 0.0
  %94 = vmatprep.subr.mxu0 0.0
  %95 = vmatpush2.msra.mxu0 0.0
  %96 = vmatprep.mubr.f32.mxu0 0.0
  %v97 = vand.u32 %v26, 4294901760
  %v98 = vsub.f32 %v26, %v97
  %v99 = vand.u32 %v98, 4294901760
  %v100 = vsub.f32 %v98, %v99
  %v101 = vand.u32 %v100, 4294901760
  %102 = vmatmul.mubr.f32.gmra.mxu0 %v101
  %v103 = vpop.f32.mrf.mxu0
  %v104 = vadd.f32 0.0, %v103
  %v105 = vpop.f32.mrf.mxu0
  %106 = vdwg.mxu0
  %107 = vmatprep.subr.mxu0 0.0
  %108 = vmatpush1.msra.mxu0 0.0
  %109 = vmatprep.subr.mxu0 0.0
  %110 = vmatpush1.msra.mxu0 0.0
  %111 = vmatprep.subr.mxu0 0.0
  %112 = vmatpush1.msra.mxu0 0.0
  %113 = vmatprep.subr.mxu0 0.0
  %114 = vmatpush1.msra.mxu0 0.0
  %115 = vmatprep.subr.mxu0 0.0
  %116 = vmatpush1.msra.mxu0 0.0
  %117 = vmatprep.subr.mxu0 0.0
  %118 = vmatpush1.msra.mxu0 0.0
  %119 = vmatprep.subr.mxu0 0.0
  %120 = vmatpush1.msra.mxu0 0.0
  %121 = vmatprep.subr.mxu0 0.0
  %122 = vmatpush1.msra.mxu0 0.0
  %123 = vmatprep.subr.mxu0 0.0
  %124 = vmatpush1.msra.mxu0 0.0
  %125 = vmatprep.subr.mxu0 0.0
  %126 = vmatpush1.msra.mxu0 0.0
  %127 = vmatprep.subr.mxu0 0.0
  %128 = vmatpush1.msra.mxu0 0.0
  %129 = vmatprep.subr.mxu0 0.0
  %130 = vmatpush1.msra.mxu0 0.0
  %131 = vmatprep.subr.mxu0 0.0
  %v132 = vand.u32 %v23, 4294901760
  %v133 = vsub.f32 %v23, %v132
  %v134 = vand.u32 %v133, 4294901760
  %v135 = vsub.f32 %v133, %v134
  %v136 = vand.u32 %v135, 4294901760
  %137 = vmatpush1.msra.mxu0 %v136
  %138 = vmatprep.subr.mxu0 0.0
  %v139 = vand.u32 %v22, 4294901760
  %v140 = vsub.f32 %v22, %v139
  %v141 = vand.u32 %v140, 4294901760
  %v142 = vsub.f32 %v140, %v141
  %v143 = vand.u32 %v142, 4294901760
  %144 = vmatpush1.msra.mxu0 %v143
  %145 = vmatprep.subr.mxu0 0.0
  %v146 = vand.u32 %v21, 4294901760
  %v147 = vsub.f32 %v21, %v146
  %v148 = vand.u32 %v147, 4294901760
  %v149 = vsub.f32 %v147, %v148
  %v150 = vand.u32 %v149, 4294901760
  %151 = vmatpush1.msra.mxu0 %v150
  %152 = vmatprep.subr.mxu0 0.0
  %v153 = vand.u32 %v20, 4294901760
  %v154 = vsub.f32 %v20, %v153
  %v155 = vand.u32 %v154, 4294901760
  %v156 = vsub.f32 %v154, %v155
  %v157 = vand.u32 %v156, 4294901760
  %158 = vmatpush1.msra.mxu0 %v157
  %159 = vmatprep.subr.mxu0 0.0
  %160 = vmatpush2.msra.mxu0 0.0
  %161 = vmatprep.subr.mxu0 0.0
  %162 = vmatpush2.msra.mxu0 0.0
  %163 = vmatprep.subr.mxu0 0.0
  %164 = vmatpush2.msra.mxu0 0.0
  %165 = vmatprep.subr.mxu0 0.0
  %166 = vmatpush2.msra.mxu0 0.0
  %167 = vmatprep.subr.mxu0 0.0
  %168 = vmatpush2.msra.mxu0 0.0
  %169 = vmatprep.subr.mxu0 0.0
  %170 = vmatpush2.msra.mxu0 0.0
  %171 = vmatprep.subr.mxu0 0.0
  %172 = vmatpush2.msra.mxu0 0.0
  %173 = vmatprep.subr.mxu0 0.0
  %174 = vmatpush2.msra.mxu0 0.0
  %175 = vmatprep.subr.mxu0 0.0
  %176 = vmatpush2.msra.mxu0 0.0
  %177 = vmatprep.subr.mxu0 0.0
  %178 = vmatpush2.msra.mxu0 0.0
  %179 = vmatprep.subr.mxu0 0.0
  %180 = vmatpush2.msra.mxu0 0.0
  %181 = vmatprep.subr.mxu0 0.0
  %182 = vmatpush2.msra.mxu0 0.0
  %183 = vmatprep.subr.mxu0 0.0
  %184 = vmatpush2.msra.mxu0 0.0
  %185 = vmatprep.subr.mxu0 0.0
  %186 = vmatpush2.msra.mxu0 0.0
  %187 = vmatprep.subr.mxu0 0.0
  %188 = vmatpush2.msra.mxu0 0.0
  %189 = vmatprep.subr.mxu0 0.0
  %190 = vmatpush2.msra.mxu0 0.0
  %191 = vmatprep.mubr.f32.mxu0 0.0
  %v192 = vand.u32 %v26, 4294901760
  %193 = vmatmul.mubr.f32.gmra.mxu0 %v192
  %v194 = vpop.f32.mrf.mxu0
  %v195 = vadd.f32 %v104, %v194
  %v196 = vpop.f32.mrf.mxu0
  %197 = vdwg.mxu0
  %198 = vmatprep.subr.mxu0 0.0
  %199 = vmatpush1.msra.mxu0 0.0
  %200 = vmatprep.subr.mxu0 0.0
  %201 = vmatpush1.msra.mxu0 0.0
  %202 = vmatprep.subr.mxu0 0.0
  %203 = vmatpush1.msra.mxu0 0.0
  %204 = vmatprep.subr.mxu0 0.0
  %205 = vmatpush1.msra.mxu0 0.0
  %206 = vmatprep.subr.mxu0 0.0
  %207 = vmatpush1.msra.mxu0 0.0
  %208 = vmatprep.subr.mxu0 0.0
  %209 = vmatpush1.msra.mxu0 0.0
  %210 = vmatprep.subr.mxu0 0.0
  %211 = vmatpush1.msra.mxu0 0.0
  %212 = vmatprep.subr.mxu0 0.0
  %213 = vmatpush1.msra.mxu0 0.0
  %214 = vmatprep.subr.mxu0 0.0
  %215 = vmatpush1.msra.mxu0 0.0
  %216 = vmatprep.subr.mxu0 0.0
  %217 = vmatpush1.msra.mxu0 0.0
  %218 = vmatprep.subr.mxu0 0.0
  %219 = vmatpush1.msra.mxu0 0.0
  %220 = vmatprep.subr.mxu0 0.0
  %221 = vmatpush1.msra.mxu0 0.0
  %222 = vmatprep.subr.mxu0 0.0
  %v223 = vand.u32 %v23, 4294901760
  %v224 = vsub.f32 %v23, %v223
  %225 = vmatpush1.msra.mxu0 %v224
  %226 = vmatprep.subr.mxu0 0.0
  %v227 = vand.u32 %v22, 4294901760
  %v228 = vsub.f32 %v22, %v227
  %229 = vmatpush1.msra.mxu0 %v228
  %230 = vmatprep.subr.mxu0 0.0
  %v231 = vand.u32 %v21, 4294901760
  %v232 = vsub.f32 %v21, %v231
  %233 = vmatpush1.msra.mxu0 %v232
  %234 = vmatprep.subr.mxu0 0.0
  %v235 = vand.u32 %v20, 4294901760
  %v236 = vsub.f32 %v20, %v235
  %237 = vmatpush1.msra.mxu0 %v236
  %238 = vmatprep.subr.mxu0 0.0
  %239 = vmatpush2.msra.mxu0 0.0
  %240 = vmatprep.subr.mxu0 0.0
  %241 = vmatpush2.msra.mxu0 0.0
  %242 = vmatprep.subr.mxu0 0.0
  %243 = vmatpush2.msra.mxu0 0.0
  %244 = vmatprep.subr.mxu0 0.0
  %245 = vmatpush2.msra.mxu0 0.0
  %246 = vmatprep.subr.mxu0 0.0
  %247 = vmatpush2.msra.mxu0 0.0
  %248 = vmatprep.subr.mxu0 0.0
  %249 = vmatpush2.msra.mxu0 0.0
  %250 = vmatprep.subr.mxu0 0.0
  %251 = vmatpush2.msra.mxu0 0.0
  %252 = vmatprep.subr.mxu0 0.0
  %253 = vmatpush2.msra.mxu0 0.0
  %254 = vmatprep.subr.mxu0 0.0
  %255 = vmatpush2.msra.mxu0 0.0
  %256 = vmatprep.subr.mxu0 0.0
  %257 = vmatpush2.msra.mxu0 0.0
  %258 = vmatprep.subr.mxu0 0.0
  %259 = vmatpush2.msra.mxu0 0.0
  %260 = vmatprep.subr.mxu0 0.0
  %261 = vmatpush2.msra.mxu0 0.0
  %262 = vmatprep.subr.mxu0 0.0
  %263 = vmatpush2.msra.mxu0 0.0
  %264 = vmatprep.subr.mxu0 0.0
  %265 = vmatpush2.msra.mxu0 0.0
  %266 = vmatprep.subr.mxu0 0.0
  %267 = vmatpush2.msra.mxu0 0.0
  %268 = vmatprep.subr.mxu0 0.0
  %269 = vmatpush2.msra.mxu0 0.0
  %270 = vmatprep.mubr.f32.mxu0 0.0
  %v271 = vand.u32 %v26, 4294901760
  %v272 = vsub.f32 %v26, %v271
  %273 = vmatmul.mubr.f32.gmra.mxu0 %v272
  %v274 = vpop.f32.mrf.mxu0
  %v275 = vadd.f32 %v195, %v274
  %v276 = vpop.f32.mrf.mxu0
  %277 = vdwg.mxu0
  %278 = vmatprep.subr.mxu0 0.0
  %279 = vmatpush1.msra.mxu0 0.0
  %280 = vmatprep.subr.mxu0 0.0
  %281 = vmatpush1.msra.mxu0 0.0
  %282 = vmatprep.subr.mxu0 0.0
  %283 = vmatpush1.msra.mxu0 0.0
  %284 = vmatprep.subr.mxu0 0.0
  %285 = vmatpush1.msra.mxu0 0.0
  %286 = vmatprep.subr.mxu0 0.0
  %287 = vmatpush1.msra.mxu0 0.0
  %288 = vmatprep.subr.mxu0 0.0
  %289 = vmatpush1.msra.mxu0 0.0
  %290 = vmatprep.subr.mxu0 0.0
  %291 = vmatpush1.msra.mxu0 0.0
  %292 = vmatprep.subr.mxu0 0.0
  %293 = vmatpush1.msra.mxu0 0.0
  %294 = vmatprep.subr.mxu0 0.0
  %295 = vmatpush1.msra.mxu0 0.0
  %296 = vmatprep.subr.mxu0 0.0
  %297 = vmatpush1.msra.mxu0 0.0
  %298 = vmatprep.subr.mxu0 0.0
  %299 = vmatpush1.msra.mxu0 0.0
  %300 = vmatprep.subr.mxu0 0.0
  %301 = vmatpush1.msra.mxu0 0.0
  %302 = vmatprep.subr.mxu0 0.0
  %v303 = vand.u32 %v23, 4294901760
  %304 = vmatpush1.msra.mxu0 %v303
  %305 = vmatprep.subr.mxu0 0.0
  %v306 = vand.u32 %v22, 4294901760
  %307 = vmatpush1.msra.mxu0 %v306
  %308 = vmatprep.subr.mxu0 0.0
  %v309 = vand.u32 %v21, 4294901760
  %310 = vmatpush1.msra.mxu0 %v309
  %311 = vmatprep.subr.mxu0 0.0
  %v312 = vand.u32 %v20, 4294901760
  %313 = vmatpush1.msra.mxu0 %v312
  %314 = vmatprep.subr.mxu0 0.0
  %315 = vmatpush2.msra.mxu0 0.0
  %316 = vmatprep.subr.mxu0 0.0
  %317 = vmatpush2.msra.mxu0 0.0
  %318 = vmatprep.subr.mxu0 0.0
  %319 = vmatpush2.msra.mxu0 0.0
  %320 = vmatprep.subr.mxu0 0.0
  %321 = vmatpush2.msra.mxu0 0.0
  %322 = vmatprep.subr.mxu0 0.0
  %323 = vmatpush2.msra.mxu0 0.0
  %324 = vmatprep.subr.mxu0 0.0
  %325 = vmatpush2.msra.mxu0 0.0
  %326 = vmatprep.subr.mxu0 0.0
  %327 = vmatpush2.msra.mxu0 0.0
  %328 = vmatprep.subr.mxu0 0.0
  %329 = vmatpush2.msra.mxu0 0.0
  %330 = vmatprep.subr.mxu0 0.0
  %331 = vmatpush2.msra.mxu0 0.0
  %332 = vmatprep.subr.mxu0 0.0
  %333 = vmatpush2.msra.mxu0 0.0
  %334 = vmatprep.subr.mxu0 0.0
  %335 = vmatpush2.msra.mxu0 0.0
  %336 = vmatprep.subr.mxu0 0.0
  %337 = vmatpush2.msra.mxu0 0.0
  %338 = vmatprep.subr.mxu0 0.0
  %339 = vmatpush2.msra.mxu0 0.0
  %340 = vmatprep.subr.mxu0 0.0
  %341 = vmatpush2.msra.mxu0 0.0
  %342 = vmatprep.subr.mxu0 0.0
  %343 = vmatpush2.msra.mxu0 0.0
  %344 = vmatprep.subr.mxu0 0.0
  %345 = vmatpush2.msra.mxu0 0.0
  %346 = vmatprep.mubr.f32.mxu0 0.0
  %v347 = vand.u32 %v26, 4294901760
  %v348 = vsub.f32 %v26, %v347
  %v349 = vand.u32 %v348, 4294901760
  %350 = vmatmul.mubr.f32.gmra.mxu0 %v349
  %v351 = vpop.f32.mrf.mxu0
  %v352 = vadd.f32 %v275, %v351
  %v353 = vpop.f32.mrf.mxu0
  %354 = vdwg.mxu0
  %355 = vmatprep.subr.mxu0 0.0
  %356 = vmatpush1.msra.mxu0 0.0
  %357 = vmatprep.subr.mxu0 0.0
  %358 = vmatpush1.msra.mxu0 0.0
  %359 = vmatprep.subr.mxu0 0.0
  %360 = vmatpush1.msra.mxu0 0.0
  %361 = vmatprep.subr.mxu0 0.0
  %362 = vmatpush1.msra.mxu0 0.0
  %363 = vmatprep.subr.mxu0 0.0
  %364 = vmatpush1.msra.mxu0 0.0
  %365 = vmatprep.subr.mxu0 0.0
  %366 = vmatpush1.msra.mxu0 0.0
  %367 = vmatprep.subr.mxu0 0.0
  %368 = vmatpush1.msra.mxu0 0.0
  %369 = vmatprep.subr.mxu0 0.0
  %370 = vmatpush1.msra.mxu0 0.0
  %371 = vmatprep.subr.mxu0 0.0
  %372 = vmatpush1.msra.mxu0 0.0
  %373 = vmatprep.subr.mxu0 0.0
  %374 = vmatpush1.msra.mxu0 0.0
  %375 = vmatprep.subr.mxu0 0.0
  %376 = vmatpush1.msra.mxu0 0.0
  %377 = vmatprep.subr.mxu0 0.0
  %378 = vmatpush1.msra.mxu0 0.0
  %379 = vmatprep.subr.mxu0 0.0
  %v380 = vand.u32 %v23, 4294901760
  %v381 = vsub.f32 %v23, %v380
  %v382 = vand.u32 %v381, 4294901760
  %383 = vmatpush1.msra.mxu0 %v382
  %384 = vmatprep.subr.mxu0 0.0
  %v385 = vand.u32 %v22, 4294901760
  %v386 = vsub.f32 %v22, %v385
  %v387 = vand.u32 %v386, 4294901760
  %388 = vmatpush1.msra.mxu0 %v387
  %389 = vmatprep.subr.mxu0 0.0
  %v390 = vand.u32 %v21, 4294901760
  %v391 = vsub.f32 %v21, %v390
  %v392 = vand.u32 %v391, 4294901760
  %393 = vmatpush1.msra.mxu0 %v392
  %394 = vmatprep.subr.mxu0 0.0
  %v395 = vand.u32 %v20, 4294901760
  %v396 = vsub.f32 %v20, %v395
  %v397 = vand.u32 %v396, 4294901760
  %398 = vmatpush1.msra.mxu0 %v397
  %399 = vmatprep.subr.mxu0 0.0
  %400 = vmatpush2.msra.mxu0 0.0
  %401 = vmatprep.subr.mxu0 0.0
  %402 = vmatpush2.msra.mxu0 0.0
  %403 = vmatprep.subr.mxu0 0.0
  %404 = vmatpush2.msra.mxu0 0.0
  %405 = vmatprep.subr.mxu0 0.0
  %406 = vmatpush2.msra.mxu0 0.0
  %407 = vmatprep.subr.mxu0 0.0
  %408 = vmatpush2.msra.mxu0 0.0
  %409 = vmatprep.subr.mxu0 0.0
  %410 = vmatpush2.msra.mxu0 0.0
  %411 = vmatprep.subr.mxu0 0.0
  %412 = vmatpush2.msra.mxu0 0.0
  %413 = vmatprep.subr.mxu0 0.0
  %414 = vmatpush2.msra.mxu0 0.0
  %415 = vmatprep.subr.mxu0 0.0
  %416 = vmatpush2.msra.mxu0 0.0
  %417 = vmatprep.subr.mxu0 0.0
  %418 = vmatpush2.msra.mxu0 0.0
  %419 = vmatprep.subr.mxu0 0.0
  %420 = vmatpush2.msra.mxu0 0.0
  %421 = vmatprep.subr.mxu0 0.0
  %422 = vmatpush2.msra.mxu0 0.0
  %423 = vmatprep.subr.mxu0 0.0
  %424 = vmatpush2.msra.mxu0 0.0
  %425 = vmatprep.subr.mxu0 0.0
  %426 = vmatpush2.msra.mxu0 0.0
  %427 = vmatprep.subr.mxu0 0.0
  %428 = vmatpush2.msra.mxu0 0.0
  %429 = vmatprep.subr.mxu0 0.0
  %430 = vmatpush2.msra.mxu0 0.0
  %431 = vmatprep.mubr.f32.mxu0 0.0
  %v432 = vand.u32 %v26, 4294901760
  %433 = vmatmul.mubr.f32.gmra.mxu0 %v432
  %v434 = vpop.f32.mrf.mxu0
  %v435 = vadd.f32 %v352, %v434
  %v436 = vpop.f32.mrf.mxu0
  %437 = vdwg.mxu0
  %438 = vmatprep.subr.mxu0 0.0
  %439 = vmatpush1.msra.mxu0 0.0
  %440 = vmatprep.subr.mxu0 0.0
  %441 = vmatpush1.msra.mxu0 0.0
  %442 = vmatprep.subr.mxu0 0.0
  %443 = vmatpush1.msra.mxu0 0.0
  %444 = vmatprep.subr.mxu0 0.0
  %445 = vmatpush1.msra.mxu0 0.0
  %446 = vmatprep.subr.mxu0 0.0
  %447 = vmatpush1.msra.mxu0 0.0
  %448 = vmatprep.subr.mxu0 0.0
  %449 = vmatpush1.msra.mxu0 0.0
  %450 = vmatprep.subr.mxu0 0.0
  %451 = vmatpush1.msra.mxu0 0.0
  %452 = vmatprep.subr.mxu0 0.0
  %453 = vmatpush1.msra.mxu0 0.0
  %454 = vmatprep.subr.mxu0 0.0
  %455 = vmatpush1.msra.mxu0 0.0
  %456 = vmatprep.subr.mxu0 0.0
  %457 = vmatpush1.msra.mxu0 0.0
  %458 = vmatprep.subr.mxu0 0.0
  %459 = vmatpush1.msra.mxu0 0.0
  %460 = vmatprep.subr.mxu0 0.0
  %461 = vmatpush1.msra.mxu0 0.0
  %462 = vmatprep.subr.mxu0 0.0
  %v463 = vand.u32 %v23, 4294901760
  %464 = vmatpush1.msra.mxu0 %v463
  %465 = vmatprep.subr.mxu0 0.0
  %v466 = vand.u32 %v22, 4294901760
  %467 = vmatpush1.msra.mxu0 %v466
  %468 = vmatprep.subr.mxu0 0.0
  %v469 = vand.u32 %v21, 4294901760
  %470 = vmatpush1.msra.mxu0 %v469
  %471 = vmatprep.subr.mxu0 0.0
  %v472 = vand.u32 %v20, 4294901760
  %473 = vmatpush1.msra.mxu0 %v472
  %474 = vmatprep.subr.mxu0 0.0
  %475 = vmatpush2.msra.mxu0 0.0
  %476 = vmatprep.subr.mxu0 0.0
  %477 = vmatpush2.msra.mxu0 0.0
  %478 = vmatprep.subr.mxu0 0.0
  %479 = vmatpush2.msra.mxu0 0.0
  %480 = vmatprep.subr.mxu0 0.0
  %481 = vmatpush2.msra.mxu0 0.0
  %482 = vmatprep.subr.mxu0 0.0
  %483 = vmatpush2.msra.mxu0 0.0
  %484 = vmatprep.subr.mxu0 0.0
  %485 = vmatpush2.msra.mxu0 0.0
  %486 = vmatprep.subr.mxu0 0.0
  %487 = vmatpush2.msra.mxu0 0.0
  %488 = vmatprep.subr.mxu0 0.0
  %489 = vmatpush2.msra.mxu0 0.0
  %490 = vmatprep.subr.mxu0 0.0
  %491 = vmatpush2.msra.mxu0 0.0
  %492 = vmatprep.subr.mxu0 0.0
  %493 = vmatpush2.msra.mxu0 0.0
  %494 = vmatprep.subr.mxu0 0.0
  %495 = vmatpush2.msra.mxu0 0.0
  %496 = vmatprep.subr.mxu0 0.0
  %497 = vmatpush2.msra.mxu0 0.0
  %498 = vmatprep.subr.mxu0 0.0
  %499 = vmatpush2.msra.mxu0 0.0
  %500 = vmatprep.subr.mxu0 0.0
  %501 = vmatpush2.msra.mxu0 0.0
  %502 = vmatprep.subr.mxu0 0.0
  %503 = vmatpush2.msra.mxu0 0.0
  %504 = vmatprep.subr.mxu0 0.0
  %505 = vmatpush2.msra.mxu0 0.0
  %506 = vmatprep.mubr.f32.mxu0 0.0
  %v507 = vand.u32 %v26, 4294901760
  %508 = vmatmul.mubr.f32.gmra.mxu0 %v507
  %v509 = vpop.f32.mrf.mxu0
  %v510 = vadd.f32 %v435, %v509
  %v511 = vpop.f32.mrf.mxu0
  %512 = vdwg.mxu0
  %v513 = vadd.f32 %v18, %v510
  %vm514 = vcmask 523264
  %515 = vst.msk [vmem:[%s4] sm:$0xff] %vm514, %v513
  // Predicated region
  $region18: #{positional_encoding.1} parent=0 // pred_check
    _
  $region19: #{positional_encoding.1} parent=0 // pred_check_branch
    %517 = sbr.rel (0) target = $region21
  $region20: #{positional_encoding.1} parent=0 // pred_region
    _
  $region21: #{positional_encoding.1} parent=0 // pred_fallthru
    _
  // Predicated region
  $region22: #{positional_encoding.1} parent=0 // pred_check
    _
  $region23: #{positional_encoding.1} parent=0 // pred_check_branch
    %519 = sbr.rel (0) target = $region25
  $region24: #{positional_encoding.1} parent=0 // pred_region
    _
  $region25: #{positional_encoding.1} parent=0 // pred_fallthru
    _

</llo_original>
